<compile_context>
chip_gen: v7x
topology: tpu7x:2x2x1
jax: 0.10.0
libtpu: 0.0.40
codegen_flags: <defaults>
</compile_context>

<pallas_src>
import jax
import jax.numpy as jnp
from jax.experimental import pallas as pl
from jax.experimental.pallas import tpu as pltpu

EMBEDDING_DIM = 32   # D
SEQ_LEN = 8          # N
BATCH = 2            # B

# Per-block VMEM budget (double-buffered x tile + out tile). Kept well under the
# 32 MiB scoped-VMEM default so one tile size works on v5e / v6e / v7x.
_VMEM_BUDGET_BYTES = 16 * 1024 * 1024


def seqpool_kernel(x_ref, w_ref, b_ref, o_ref):
    # x_ref: (TB, N, D) embeddings block (VMEM)
    # w_ref: (1, D) linear weight, lane-contiguous (VMEM, untiled)
    # b_ref: (1,) linear bias (SMEM, scalar read; kept only for op-for-op parity --
    #        softmax is shift-invariant so it cannot change the output)
    # o_ref: (TB, D) pooled output block (VMEM), single dense store
    x = x_ref[...].astype(jnp.float32)                # (TB, N, D)
    w = w_ref[...].astype(jnp.float32)                # (1, D)
    b = b_ref[0]                                      # scalar

    # Linear(D -> 1) on the VPU: elementwise multiply rides the VALU slots,
    # the lane reduce goes to the XLU slot; no MXU push/pop latency.
    scores = jnp.sum(x * w[None, :, :], axis=-1, keepdims=True) + b   # (TB, N, 1)

    # Softmax over the sequence axis (PyTorch dim=2 after permute == N here).
    m = jnp.max(scores, axis=1, keepdims=True)        # (TB, 1, 1)
    e = jnp.exp(scores - m)                           # (TB, N, 1)
    denom = jnp.sum(e, axis=1, keepdims=True)         # (TB, 1, 1)
    inv = pl.reciprocal(denom, approx=True)           # EUP vrcp; co-issues with VALU
    inv = inv * (2.0 - denom * inv)                   # one Newton step -> f32 accuracy
    p = e * inv                                       # (TB, N, 1)

    # attn @ x  ==  sum_n p[b, n] * x[b, n, :]  -> (TB, D), one dense store.
    o_ref[...] = jnp.sum(p * x, axis=1).astype(o_ref.dtype)


def _choose_batch_tile(B, N, D, itemsize):
    # Double-buffered x block + double-buffered out block per batch row.
    per_row = 2 * (N * D + D) * itemsize
    tb = max(1, _VMEM_BUDGET_BYTES // per_row)
    if tb >= B:
        return B                                      # single block (toy shapes)
    tb = max(8, (tb // 8) * 8)                        # sublane-aligned partial blocks
    return min(tb, B)


def seqpool(x, w, b):
    """x: (B, N, D) f32, w: (1, D) f32, b: (1,) f32 -> (B, 1, D) f32."""
    B, N, D = x.shape
    tb = _choose_batch_tile(B, N, D, x.dtype.itemsize)
    num_blocks = pl.cdiv(B, tb)
    Bp = num_blocks * tb
    if Bp != B:
        # Pad batch so the grid tiles evenly; padded rows are sliced off below.
        x = jnp.pad(x, ((0, Bp - B), (0, 0), (0, 0)))

    out = pl.pallas_call(
        seqpool_kernel,
        out_shape=jax.ShapeDtypeStruct((Bp, D), jnp.float32),
        grid=(num_blocks,),
        in_specs=[
            pl.BlockSpec((tb, N, D), lambda i: (i, 0, 0)),            # x, batch-tiled
            pl.BlockSpec(memory_space=pltpu.MemorySpace.VMEM),        # w, (1, D) untiled
            pl.BlockSpec(memory_space=pltpu.MemorySpace.SMEM),        # b, (1,) scalar
        ],
        out_specs=pl.BlockSpec((tb, D), lambda i: (i, 0)),
        compiler_params=pltpu.CompilerParams(
            dimension_semantics=("parallel",),        # shard batch blocks across TCs (v7x)
            vmem_limit_bytes=32 * 1024 * 1024,        # safe on v5e/v6e/v7x
        ),
    )(x, w, b)
    # Restore the PyTorch output shape (B, 1, D) outside the kernel.
    return out[:B, None, :]


def seqpool_ref(x, w, b):
    # w: (1, D) like torch.nn.Linear(D, 1).weight; b: (1,)
    scores = jnp.einsum("bnd,od->bno", x, w) + b                      # (B, N, 1)
    attn = jax.nn.softmax(jnp.transpose(scores, (0, 2, 1)), axis=2)   # (B, 1, N)
    return attn @ x                                                   # (B, 1, D)


if __name__ == "__main__":
    key = jax.random.PRNGKey(0)
    kx, kw, kb = jax.random.split(key, 3)

    # Deterministic parameter init (shapes as torch.nn.Linear(EMBEDDING_DIM, 1):
    # weight (1, D), bias (1,)).
    bound = 1.0 / (EMBEDDING_DIM ** 0.5)
    w = jax.random.uniform(kw, (1, EMBEDDING_DIM), jnp.float32, -bound, bound)
    b = jax.random.uniform(kb, (1,), jnp.float32, -bound, bound)

    x = jax.random.normal(kx, (BATCH, SEQ_LEN, EMBEDDING_DIM), jnp.float32)

    out = seqpool(x, w, b)
    jax.block_until_ready(out)

    ref = seqpool_ref(x, w, b)
    assert out.shape == (BATCH, 1, EMBEDDING_DIM)
    assert jnp.allclose(out, ref, atol=1e-5, rtol=1e-5)

    print("KERNEL_OK")
</pallas_src>

<mosaic_0001>
module attributes {stable_mosaic.version = 11 : i64} {
  func.func @seqpool_kernel(%arg0: i32, %arg1: memref<2x8x32xf32, #tpu.memory_space<vmem>>, %arg2: memref<1x32xf32, #tpu.memory_space<vmem>>, %arg3: memref<1xf32, #tpu.memory_space<smem>>, %arg4: memref<2x32xf32, #tpu.memory_space<vmem>>) attributes {dimension_semantics = [#tpu.dimension_semantics<parallel>], iteration_bounds = array<i64: 1>, scalar_prefetch = 0 : i64, scratch_operands = 0 : i64, tpu.core_type = #tpu.core_type<tc>, window_params = [{transform_indices = @transform_0, window_bounds = array<i64: 2, 8, 32>}, {pipeline_mode = #tpu.pipeline_mode<synchronous>, transform_indices = @transform_1, window_bounds = array<i64: 1, 32>}, {transform_indices = @transform_2, window_bounds = array<i64: 1>}, {transform_indices = @transform_3, window_bounds = array<i64: 2, 32>}]} {
    %c0 = arith.constant 0 : index
    %c0_0 = arith.constant 0 : index
    %c0_1 = arith.constant 0 : index
    %0 = vector.load %arg1[%c0, %c0_0, %c0_1] : memref<2x8x32xf32, #tpu.memory_space<vmem>>, vector<2x8x32xf32>
    %c0_2 = arith.constant 0 : index
    %c0_3 = arith.constant 0 : index
    %1 = vector.load %arg2[%c0_2, %c0_3] : memref<1x32xf32, #tpu.memory_space<vmem>>, vector<1x32xf32>
    %c0_4 = arith.constant 0 : index
    %2 = memref.load %arg3[%c0_4] : memref<1xf32, #tpu.memory_space<smem>>
    %3 = vector.shape_cast %1 : vector<1x32xf32> to vector<1x1x32xf32>
    %4 = vector.broadcast %3 : vector<1x1x32xf32> to vector<2x8x32xf32>
    %5 = arith.mulf %0, %4 : vector<2x8x32xf32>
    %cst = arith.constant dense<0.000000e+00> : vector<2x8xf32>
    %6 = vector.multi_reduction <add>, %5, %cst [2] : vector<2x8x32xf32> to vector<2x8xf32>
    %7 = vector.shape_cast %6 : vector<2x8xf32> to vector<2x8x1xf32>
    %8 = vector.broadcast %2 : f32 to vector<2x8x1xf32>
    %9 = arith.addf %7, %8 : vector<2x8x1xf32>
    %cst_5 = arith.constant dense<0xFF800000> : vector<2x1xf32>
    %10 = vector.multi_reduction <maximumf>, %9, %cst_5 [1] : vector<2x8x1xf32> to vector<2x1xf32>
    %11 = vector.shape_cast %10 : vector<2x1xf32> to vector<2x1x1xf32>
    %12 = vector.broadcast %11 : vector<2x1x1xf32> to vector<2x8x1xf32>
    %13 = arith.subf %9, %12 : vector<2x8x1xf32>
    %14 = math.exp %13 : vector<2x8x1xf32>
    %cst_6 = arith.constant dense<0.000000e+00> : vector<2x1xf32>
    %15 = vector.multi_reduction <add>, %14, %cst_6 [1] : vector<2x8x1xf32> to vector<2x1xf32>
    %16 = vector.shape_cast %15 : vector<2x1xf32> to vector<2x1x1xf32>
    %17 = tpu.reciprocal %16 {approx = true} : vector<2x1x1xf32> -> vector<2x1x1xf32>
    %18 = arith.mulf %16, %17 : vector<2x1x1xf32>
    %cst_7 = arith.constant 2.000000e+00 : f32
    %19 = vector.broadcast %cst_7 : f32 to vector<2x1x1xf32>
    %20 = arith.subf %19, %18 : vector<2x1x1xf32>
    %21 = arith.mulf %17, %20 : vector<2x1x1xf32>
    %22 = vector.broadcast %21 : vector<2x1x1xf32> to vector<2x8x1xf32>
    %23 = arith.mulf %14, %22 : vector<2x8x1xf32>
    %24 = vector.broadcast %23 : vector<2x8x1xf32> to vector<2x8x32xf32>
    %25 = arith.mulf %24, %0 : vector<2x8x32xf32>
    %cst_8 = arith.constant dense<0.000000e+00> : vector<2x32xf32>
    %26 = vector.multi_reduction <add>, %25, %cst_8 [1] : vector<2x8x32xf32> to vector<2x32xf32>
    %c0_9 = arith.constant 0 : index
    %c0_10 = arith.constant 0 : index
    %27 = vector.load %arg4[%c0_9, %c0_10] : memref<2x32xf32, #tpu.memory_space<vmem>>, vector<2x32xf32>
    tpu.vector_store %arg4[%c0_9, %c0_10], %26 {strides = array<i32>} : memref<2x32xf32, #tpu.memory_space<vmem>>, vector<2x32xf32>,
    return
  }
  func.func @transform_0(%arg0: i32) -> (i32, i32, i32) {
    %c0_i32 = arith.constant 0 : i32
    %c0_i32_0 = arith.constant 0 : i32
    %c0_i32_1 = arith.constant 0 : i32
    return %arg0, %c0_i32, %c0_i32_0 : i32, i32, i32
  }
  func.func @transform_1(%arg0: i32) -> (i32, i32) {
    %c0_i32 = arith.constant 0 : i32
    %c0_i32_0 = arith.constant 0 : i32
    %c0_i32_1 = arith.constant 0 : i32
    return %c0_i32, %c0_i32_0 : i32, i32
  }
  func.func @transform_2(%arg0: i32) -> i32 {
    %c0_i32 = arith.constant 0 : i32
    %c0_i32_0 = arith.constant 0 : i32
    return %c0_i32 : i32
  }
  func.func @transform_3(%arg0: i32) -> (i32, i32) {
    %c0_i32 = arith.constant 0 : i32
    %c0_i32_0 = arith.constant 0 : i32
    return %arg0, %c0_i32 : i32, i32
  }
}

</mosaic_0001>

<llo_original>
// kernel: tpu_custom_call.1
$region0: #{tpu_custom_call.1}
  #allocation0 [shape = 'u32[]', space=smem, size = 0x4, offset = 0x4, fixed_abs, tag = 'smem constant byte address 0x4 - core index']
  #allocation1 [shape = 'u32[144,128]{1,0:T(1,128)}', space=vmem, size = 0x12000, scoped, tag = 'internal scratch']
  #allocation2 [shape = 'f32[1]{0:T(128)S(6)}', space=smem, size = 0x200, scoped, tag = 'scoped memory for tpu_custom_call.1']
  %s0 = inlined_call_operand.hbm [shape: f32[2,8,32], index: 0, kind: input, shape index: {}]
  %s1 = inlined_call_operand.vmem [shape: f32[1,32], index: 1, kind: input, shape index: {}]
  %s2 = inlined_call_operand.<no memory space> [shape: f32[1], index: 2, kind: input, shape index: {}]
  %s3 = inlined_call_operand.hbm [shape: f32[2,32], index: 3, kind: output, shape index: {}]
  %s4 = sld [smem:[#allocation0]]
  $region26: #{tpu_custom_call.1} parent=0
    _
  %s6 = ssub.s32 1, %s4
  %s7 = scalar_select 0, %s6, %s4
  %8 = sst [smem:[#allocation2]] %s2
  $region1: #{tpu_custom_call.1} parent=0
    #allocation3 [shape = 'u8[8192]{0}', space=vmem, size = 0x2000, scoped, tag = 'input window, operand 0, single buffered']
    #allocation4 [shape = 's32[1]{0}', space=sflag, size = 0x4, scoped, tag = 'scoped memory for tpu_custom_call.1']
    #allocation5 [shape = 's32[1]{0}', space=sflag, size = 0x4, scoped, tag = 'scoped memory for tpu_custom_call.1']
    #allocation6 [shape = 'u8[1024]{0}', space=vmem, size = 0x400, scoped, tag = 'output window, operand 0, single buffered']
    %9 = vsyncpa [#allocation4], 0
    %10 = vsyncpa [#allocation5], 0
    // Predicated region
    $region2: #{tpu_custom_call.1} parent=1 // pred_check
      _
    $region3: #{tpu_custom_call.1} parent=1 // pred_check_branch
      %12 = sbr.rel (0) target = $region5
    $region4: #{tpu_custom_call.1} parent=1 // pred_region
      %s14 = ssub.s32 256, 256
      %15 = vsyncadd [#allocation4], %s14
      %s16 = sshll.u32 [#allocation3], 4
      %s17 = int_to_ptr.vmem [resolvable:$true] %s16
      %22 = dma.hbm_to_vmem [thread:$0]  %s0, 256, %s17, [#allocation4], 128, 128, 8
    $region5: #{tpu_custom_call.1} parent=1 // pred_fallthru
      _
    // Predicated region
    $region6: #{tpu_custom_call.1} parent=1 // pred_check
      _
    $region7: #{tpu_custom_call.1} parent=1 // pred_check_branch
      %24 = sbr.rel (0) target = $region9
    $region8: #{tpu_custom_call.1} parent=1 // pred_region
      _
    $region9: #{tpu_custom_call.1} parent=1 // pred_fallthru
      _
    // Predicated region
    $region10: #{tpu_custom_call.1} parent=1 // pred_check
      _
    $region11: #{tpu_custom_call.1} parent=1 // pred_check_branch
      %26 = sbr.rel (0) target = $region13
    $region12: #{tpu_custom_call.1} parent=1 // pred_region
      _
    $region13: #{tpu_custom_call.1} parent=1 // pred_fallthru
      _
    // Predicated region
    $region14: #{tpu_custom_call.1} parent=1 // pred_check
      _
    $region15: #{tpu_custom_call.1} parent=1 // pred_check_branch
      %28 = sbr.rel (0) target = $region17
    $region16: #{tpu_custom_call.1} parent=1 // pred_region
      %29 = dma.done [#allocation4], 256
    $region17: #{tpu_custom_call.1} parent=1 // pred_fallthru
      _
    %v30 = vld [vmem:[#allocation3] sm:$0xff]
    %v31 = vld [vmem:[#allocation3 + $0x8] sm:$0xff]
    %v32 = vld [vmem:[%s1] sm:$0x1]
    %s33 = sld [smem:[#allocation2]]
    %v35 = vlaneseq
    %v36 = vshrl.u32 %v35, 7
    %v37 = vsub.s32 0, %v36
    %v38 = vrot.slane %v32, %v37
    %v40 = vmul.f32 %v30, %v38
    %v41 = vmul.f32 %v31, %v38
    %vm42 = vcmask 261120
    %v43 = vsel %vm42, %v40, 0.0
    %44 = vadd.xlane.f32.xlu0 %v43
    %v45 = vpop.xlane.xlu0 %44
    %v46 = vsel %vm42, %v41, 0.0
    %47 = vadd.xlane.f32.xlu0 %v46
    %v48 = vpop.xlane.xlu0 %47
    %v49 = vstv %s33
    %v50 = vadd.f32 %v45, %v49
    %v51 = vadd.f32 %v48, %v49
    %v52 = vrot.slane %v50, 4
    %v53 = vmax.f32 %v50, %v52
    %v54 = vrot.slane %v53, 2
    %v55 = vmax.f32 %v53, %v54
    %v56 = vrot.slane %v55, 1
    %v57 = vmax.f32 %v55, %v56
    %v58 = vrot.slane %v51, 4
    %v59 = vmax.f32 %v51, %v58
    %v60 = vrot.slane %v59, 2
    %v61 = vmax.f32 %v59, %v60
    %v62 = vrot.slane %v61, 1
    %v63 = vmax.f32 %v61, %v62
    %v64 = vsub.f32 %v50, %v57
    %v65 = vsub.f32 %v51, %v63
    %v66 = vmul.f32 %v64, 1.442695
    %v67 = vpow.pop %v66
    %v68 = vmul.f32 %v65, 1.442695
    %v69 = vpow.pop %v68
    %v70 = vrot.slane %v67, 4
    %v71 = vadd.f32 %v67, %v70
    %v72 = vrot.slane %v71, 2
    %v73 = vadd.f32 %v71, %v72
    %v74 = vrot.slane %v73, 1
    %v75 = vadd.f32 %v73, %v74
    %v76 = vrot.slane %v69, 4
    %v77 = vadd.f32 %v69, %v76
    %v78 = vrot.slane %v77, 2
    %v79 = vadd.f32 %v77, %v78
    %v80 = vrot.slane %v79, 1
    %v81 = vadd.f32 %v79, %v80
    %v82 = vrcp.pop %v75
    %v83 = vrcp.pop %v81
    %v84 = vmul.f32 %v75, %v82
    %v85 = vmul.f32 %v81, %v83
    %v86 = vsub.f32 2.0, %v84
    %v87 = vsub.f32 2.0, %v85
    %v88 = vmul.f32 %v82, %v86
    %v89 = vmul.f32 %v83, %v87
    %v90 = vmul.f32 %v67, %v88
    %v91 = vmul.f32 %v69, %v89
    %v92 = vmul.f32 %v90, %v30
    %v93 = vmul.f32 %v91, %v31
    %v94 = vsel %vm42, %v92, 0.0
    %v95 = vrot.slane %v94, 4
    %v96 = vadd.f32 %v94, %v95
    %v97 = vrot.slane %v96, 2
    %v98 = vadd.f32 %v96, %v97
    %v99 = vrot.slane %v98, 1
    %v100 = vadd.f32 %v98, %v99
    %v101 = vsel %vm42, %v93, 0.0
    %v102 = vrot.slane %v101, 4
    %v103 = vadd.f32 %v101, %v102
    %v104 = vrot.slane %v103, 2
    %v105 = vadd.f32 %v103, %v104
    %v106 = vrot.slane %v105, 1
    %v107 = vadd.f32 %v105, %v106
    %vm110 = vcmask 1041409
    %v111 = vsel %vm110, %v107, %v100
    %vm113 = vcmask 254976
    %114 = vst.msk [vmem:[#allocation6] sm:$0x3] %vm113, %v111
    // Predicated region
    $region18: #{tpu_custom_call.1} parent=1 // pred_check
      _
    $region19: #{tpu_custom_call.1} parent=1 // pred_check_branch
      %116 = sbr.rel (0) target = $region21
    $region20: #{tpu_custom_call.1} parent=1 // pred_region
      %s118 = ssub.s32 32, 32
      %119 = vsyncadd [#allocation5], %s118
      %s121 = sshll.u32 [#allocation6], 4
      %s122 = int_to_ptr.vmem [resolvable:$true] %s121
      %124 = dma.vmem_to_hbm [thread:$0]  %s122, 32, %s3, [#allocation5]
    $region21: #{tpu_custom_call.1} parent=1 // pred_fallthru
      _
    // Predicated region
    $region22: #{tpu_custom_call.1} parent=1 // pred_check
      _
    $region23: #{tpu_custom_call.1} parent=1 // pred_check_branch
      %126 = sbr.rel (0) target = $region25
    $region24: #{tpu_custom_call.1} parent=1 // pred_region
      %127 = dma.done [#allocation5], 32
    $region25: #{tpu_custom_call.1} parent=1 // pred_fallthru
      _
    %128 = vsyncpa [#allocation4], 1
    %129 = vsyncpa [#allocation5], 1

</llo_original>
